<compile_context>
chip_gen: v7x
topology: tpu7x:2x2x1
jax: 0.10.0
libtpu: 0.0.40
codegen_flags: <defaults>
</compile_context>

<pallas_src>
import numpy as np
import jax
import jax.numpy as jnp
from jax.experimental import pallas as pl
from jax.experimental.pallas import tpu as pltpu

NUM_BLOCKS = 8


def _round_up(x, m):
    return (x + m - 1) // m * m


def _cdiv(a, b):
    return (a + b - 1) // b


def _densify(blocks):
    """(NB, bs, bs) stack -> (NB*bs, NB*bs) block-diagonal matrix (host prep)."""
    nb, bs, _ = blocks.shape
    out = jnp.zeros((nb * bs, nb * bs), blocks.dtype)
    for b in range(nb):
        out = out.at[b * bs:(b + 1) * bs, b * bs:(b + 1) * bs].set(blocks[b])
    return out


def _gru_kernel(za_ref, h_ref, wza_ref, whh_ref, bg_ref, uh_ref, out_ref):
    """One batch-tile of the fused BlockDiagonalGRU step.

    za_ref  : (TB, Dza)   cdt   cat(z, a)
    h_ref   : (TB, H)     f32   previous hidden state (unquantized, for blend)
    wza_ref : (Dza, 3H)   cdt   folded gate weights for the (z|a) input
    whh_ref : (H, 3H)     cdt   folded gate weights for h, U_z/U_r absorbed
    bg_ref  : (1, 3H)     f32   folded gate bias
    uh_ref  : (H, H) dense block-diag (bs < 128)  or  (NB, bs, bs) stack
    out_ref : (TB, H)     f32
    """
    f32 = jnp.float32
    cdt = wza_ref.dtype
    H = out_ref.shape[1]

    h = h_ref[...]                       # f32 copy used in the blend
    h_c = h.astype(cdt)

    # Two lane-dense MXU calls give all three gate pre-activations
    # (embedding Linear and block-diagonal U_z / U_r folded in).
    gates = (jnp.dot(za_ref[...], wza_ref[...], preferred_element_type=f32)
             + jnp.dot(h_c, whh_ref[...], preferred_element_type=f32)
             + bg_ref[...])

    # Full-width EUP/VALU ops (no per-block 16-lane slices).
    z = jax.nn.sigmoid(gates[:, :H])
    r = jax.nn.sigmoid(gates[:, H:2 * H])
    rh = (r * h).astype(cdt)

    if len(uh_ref.shape) == 2:           # bs < 128: one dense block-diag matmul
        uh = jnp.dot(rh, uh_ref[...], preferred_element_type=f32)
    else:                                # bs >= 128: lane-aligned per-block dots
        nb, bs = uh_ref.shape[0], uh_ref.shape[1]
        uh = jnp.concatenate(
            [jnp.dot(rh[:, b * bs:(b + 1) * bs], uh_ref[b],
                     preferred_element_type=f32) for b in range(nb)],
            axis=-1)

    h_tilde = jnp.tanh(gates[:, 2 * H:] + uh)

    # Single lane-dense store;  h + z*(h_tilde - h) == (1-z)*h + z*h_tilde.
    out_ref[...] = h + z * (h_tilde - h)


def prepare_gru_params(params, compute_dtype=jnp.bfloat16):
    """One-time weight preparation (hoist out of the per-step call path)."""
    H = params["W_z"].shape[0]
    Din = params["W_emb"].shape[1]
    Dza = Din - H                        # x = cat(z, a, h); h occupies the tail
    bs = H // NUM_BLOCKS
    hi = jax.lax.Precision.HIGHEST

    # Fuse the three gate projections and fold the embedding layer in (exact).
    Wg = jnp.concatenate([params["W_z"], params["W_r"], params["W_h"]], 0)   # (3H, H)
    bg = jnp.concatenate([params["b_z"], params["b_r"], params["b_h"]], 0)   # (3H,)
    W_comb = jnp.dot(Wg, params["W_emb"], precision=hi)                      # (3H, Din)
    b_comb = jnp.dot(Wg, params["b_emb"], precision=hi) + bg                 # (3H,)

    # Split into the (z|a) part and the h part, and fold the block-diagonal
    # U_z / U_r recurrences into the z/r gate rows of the h part (exact).
    W_za = W_comb[:, :Dza]                                                   # (3H, Dza)
    W_hh = W_comb[:, Dza:]                                                   # (3H, H)
    Uz_d = _densify(params["U_z"])
    Ur_d = _densify(params["U_r"])
    W_hh = W_hh.at[:H].add(Uz_d).at[H:2 * H].add(Ur_d)

    prepped = {
        "W_za_t": W_za.T.astype(compute_dtype),                  # (Dza, 3H)
        "W_hh_t": W_hh.T.astype(compute_dtype),                  # (H, 3H)
        "b_gates": b_comb.reshape(1, 3 * H).astype(jnp.float32), # (1, 3H)
    }

    # U_h acts on r*h, so it cannot be folded.  For bs < 128 a dense
    # block-diagonal (H, H) matmul is cheaper than 8 tiny K=bs dots (the MXU
    # pads K to >=128 anyway); keep the per-block stack when bs is lane-wide.
    uh_t = jnp.transpose(params["U_h"], (0, 2, 1))
    if bs < 128:
        prepped["Uh_t"] = _densify(uh_t).astype(compute_dtype)   # (H, H)
    else:
        prepped["Uh_t"] = uh_t.astype(compute_dtype)             # (NB, bs, bs)
    return prepped


def block_diagonal_gru(z_t, a_t, h_t, prepped, *, batch_tile=512,
                       min_batch_tiles=1):
    """One BlockDiagonalGRU step (continuous actions).

    Set min_batch_tiles=2 on v7x (2 TensorCores) when the batch permits.
    """
    B, H = h_t.shape
    W_za_t, W_hh_t = prepped["W_za_t"], prepped["W_hh_t"]
    bg, Uh_t = prepped["b_gates"], prepped["Uh_t"]
    Dza = W_za_t.shape[0]
    cdt = W_za_t.dtype
    wbytes = jnp.dtype(cdt).itemsize

    # Cast the small (z|a) stream in the wrapper; h stays f32 (used unquantized
    # in the blend) and is DMA'd exactly once.
    za = jnp.concatenate([z_t, a_t], axis=-1).astype(cdt)
    assert za.shape[-1] == Dza
    h_in = h_t.astype(jnp.float32)

    # Batch tiling: minimal padding (<= one sublane group per tile), optionally
    # forcing >= 2 grid steps so both v7x TensorCores get work.
    tile_cap = _round_up(batch_tile, 8)
    n_tiles = max(min_batch_tiles, _cdiv(B, tile_cap))
    n_tiles = min(n_tiles, _cdiv(B, 8))        # never create all-padding tiles
    TB = _round_up(_cdiv(B, n_tiles), 8)
    Bp = n_tiles * TB
    if Bp != B:
        za = jnp.pad(za, ((0, Bp - B), (0, 0)))
        h_in = jnp.pad(h_in, ((0, Bp - B), (0, 0)))

    # VMEM budget from the actual footprint, capped by the chip's capacity
    # (128 MiB v5e/v6e, 64 MiB per-TC v7x) with headroom.
    weight_bytes = ((Dza + H) * 3 * H + Uh_t.size) * wbytes + 3 * H * 4
    io_bytes = 2 * TB * (Dza * wbytes + 2 * H * 4)     # double-buffered za/h/out
    interm_bytes = TB * 6 * H * 4                      # gates + z/r/rh/h~ (f32)
    need = 2 * weight_bytes + io_bytes + 2 * interm_bytes
    try:
        vmem_cap = int(pltpu.get_tpu_info().vmem_capacity_bytes)
    except Exception:
        vmem_cap = 64 << 20                            # v7x per-TC VMEM
    vmem_limit = int(min(vmem_cap * 7 // 8, max(32 << 20, need)))

    if Uh_t.ndim == 2:
        uh_spec = pl.BlockSpec((H, H), lambda i: (0, 0))
    else:
        nb, bs = Uh_t.shape[0], Uh_t.shape[1]
        uh_spec = pl.BlockSpec((nb, bs, bs), lambda i: (0, 0, 0))

    out = pl.pallas_call(
        _gru_kernel,
        out_shape=jax.ShapeDtypeStruct((Bp, H), jnp.float32),
        grid=(n_tiles,),
        in_specs=[
            pl.BlockSpec((TB, Dza), lambda i: (i, 0)),
            pl.BlockSpec((TB, H), lambda i: (i, 0)),
            # Weights: constant index_map -> DMA'd once, resident across tiles.
            pl.BlockSpec((Dza, 3 * H), lambda i: (0, 0)),
            pl.BlockSpec((H, 3 * H), lambda i: (0, 0)),
            pl.BlockSpec((1, 3 * H), lambda i: (0, 0)),
            uh_spec,
        ],
        out_specs=pl.BlockSpec((TB, H), lambda i: (i, 0)),
        compiler_params=pltpu.CompilerParams(
            dimension_semantics=("parallel",),
            vmem_limit_bytes=vmem_limit),
    )(za, h_in, W_za_t, W_hh_t, bg, Uh_t)
    return out[:B]


def reference_forward(z_t, a_t, h_t, params):
    """Pure-JAX reference mirroring the PyTorch per-block loop."""
    H = h_t.shape[-1]
    bs = H // NUM_BLOCKS
    x_in = jnp.concatenate([z_t, a_t, h_t], axis=-1)
    x_t = x_in @ params["W_emb"].T + params["b_emb"]
    wz_x = x_t @ params["W_z"].T + params["b_z"]
    wr_x = x_t @ params["W_r"].T + params["b_r"]
    wh_x = x_t @ params["W_h"].T + params["b_h"]
    z_list, ht_list = [], []
    for b in range(NUM_BLOCKS):
        s, e = b * bs, (b + 1) * bs
        h_b = h_t[:, s:e]
        uz_h = h_b @ params["U_z"][b].T
        ur_h = h_b @ params["U_r"][b].T
        z_b = jax.nn.sigmoid(wz_x[:, s:e] + uz_h)
        r_b = jax.nn.sigmoid(wr_x[:, s:e] + ur_h)
        uh_h = (r_b * h_b) @ params["U_h"][b].T
        ht_b = jnp.tanh(wh_x[:, s:e] + uh_h)
        z_list.append(z_b)
        ht_list.append(ht_b)
    z_gate = jnp.concatenate(z_list, axis=-1)
    h_tilde = jnp.concatenate(ht_list, axis=-1)
    return (1.0 - z_gate) * h_t + z_gate * h_tilde


def init_params(key, z_dim, a_dim, hidden_size):
    bs = hidden_size // NUM_BLOCKS
    d_in = z_dim + a_dim + hidden_size
    ks = jax.random.split(key, 11)

    def u(k, shape, fan_in):
        bound = 1.0 / np.sqrt(fan_in)
        return jax.random.uniform(k, shape, jnp.float32, -bound, bound)

    return {
        "W_emb": u(ks[0], (hidden_size, d_in), d_in),
        "b_emb": u(ks[1], (hidden_size,), d_in),
        "W_z": u(ks[2], (hidden_size, hidden_size), hidden_size),
        "b_z": u(ks[3], (hidden_size,), hidden_size),
        "W_r": u(ks[4], (hidden_size, hidden_size), hidden_size),
        "b_r": u(ks[5], (hidden_size,), hidden_size),
        "W_h": u(ks[6], (hidden_size, hidden_size), hidden_size),
        "b_h": u(ks[7], (hidden_size,), hidden_size),
        "U_z": u(ks[8], (NUM_BLOCKS, bs, bs), bs),
        "U_r": u(ks[9], (NUM_BLOCKS, bs, bs), bs),
        "U_h": u(ks[10], (NUM_BLOCKS, bs, bs), bs),
    }


if __name__ == "__main__":
    B, z_dim, a_dim, hidden_size = 4, 16, 8, 128   # bs = 16, H lane-aligned

    key = jax.random.PRNGKey(0)
    kp, kz, ka, kh = jax.random.split(key, 4)
    params = init_params(kp, z_dim, a_dim, hidden_size)

    z_t = jax.random.normal(kz, (B, z_dim), jnp.float32)
    a_t = jax.random.normal(ka, (B, a_dim), jnp.float32)   # continuous action
    h_t = jax.random.normal(kh, (B, hidden_size), jnp.float32)

    h_ref = reference_forward(z_t, a_t, h_t, params)

    # f32-weight path: matches the reference tightly (fold reassociation only).
    prepped_f32 = prepare_gru_params(params, compute_dtype=jnp.float32)
    h_f32 = block_diagonal_gru(z_t, a_t, h_t, prepped_f32)
    jax.block_until_ready(h_f32)
    np.testing.assert_allclose(np.asarray(h_f32), np.asarray(h_ref),
                               rtol=1e-3, atol=1e-3)

    # bf16-weight path (default): bf16 MXU inputs, f32 accumulation and f32
    # gate math / blend (h kept unquantized for the blend).
    prepped_bf16 = prepare_gru_params(params, compute_dtype=jnp.bfloat16)
    h_bf16 = block_diagonal_gru(z_t, a_t, h_t, prepped_bf16)
    jax.block_until_ready(h_bf16)
    np.testing.assert_allclose(np.asarray(h_bf16), np.asarray(h_ref),
                               rtol=3e-2, atol=3e-2)

    print("KERNEL_OK")
</pallas_src>

<mosaic_0001>
module attributes {stable_mosaic.version = 11 : i64} {
  func.func @_gru_kernel(%arg0: i32, %arg1: memref<8x24xf32, #tpu.memory_space<vmem>>, %arg2: memref<8x128xf32, #tpu.memory_space<vmem>>, %arg3: memref<24x384xf32, #tpu.memory_space<vmem>>, %arg4: memref<128x384xf32, #tpu.memory_space<vmem>>, %arg5: memref<1x384xf32, #tpu.memory_space<vmem>>, %arg6: memref<128x128xf32, #tpu.memory_space<vmem>>, %arg7: memref<8x128xf32, #tpu.memory_space<vmem>>) attributes {dimension_semantics = [#tpu.dimension_semantics<parallel>], iteration_bounds = array<i64: 1>, scalar_prefetch = 0 : i64, scratch_operands = 0 : i64, tpu.core_type = #tpu.core_type<tc>, window_params = [{transform_indices = @transform_0, window_bounds = array<i64: 8, 24>}, {transform_indices = @transform_1, window_bounds = array<i64: 8, 128>}, {pipeline_mode = #tpu.pipeline_mode<synchronous>, transform_indices = @transform_2, window_bounds = array<i64: 24, 384>}, {pipeline_mode = #tpu.pipeline_mode<synchronous>, transform_indices = @transform_3, window_bounds = array<i64: 128, 384>}, {pipeline_mode = #tpu.pipeline_mode<synchronous>, transform_indices = @transform_4, window_bounds = array<i64: 1, 384>}, {pipeline_mode = #tpu.pipeline_mode<synchronous>, transform_indices = @transform_5, window_bounds = array<i64: 128, 128>}, {transform_indices = @transform_6, window_bounds = array<i64: 8, 128>}]} {
    %c0 = arith.constant 0 : index
    %c0_0 = arith.constant 0 : index
    %0 = vector.load %arg2[%c0, %c0_0] : memref<8x128xf32, #tpu.memory_space<vmem>>, vector<8x128xf32>
    %c0_1 = arith.constant 0 : index
    %c0_2 = arith.constant 0 : index
    %1 = vector.load %arg1[%c0_1, %c0_2] : memref<8x24xf32, #tpu.memory_space<vmem>>, vector<8x24xf32>
    %c0_3 = arith.constant 0 : index
    %c0_4 = arith.constant 0 : index
    %2 = vector.load %arg3[%c0_3, %c0_4] : memref<24x384xf32, #tpu.memory_space<vmem>>, vector<24x384xf32>
    %cst = arith.constant dense<0.000000e+00> : vector<8x384xf32>
    %3 = tpu.matmul %1, %2, %cst {dimension_numbers = #tpu.dot_dimension_numbers<[1], [0], [0], [1], [0, 0, 1, 1], [], []>} : vector<8x24xf32>, vector<24x384xf32>, vector<8x384xf32> -> vector<8x384xf32>
    %c0_5 = arith.constant 0 : index
    %c0_6 = arith.constant 0 : index
    %4 = vector.load %arg4[%c0_5, %c0_6] : memref<128x384xf32, #tpu.memory_space<vmem>>, vector<128x384xf32>
    %cst_7 = arith.constant dense<0.000000e+00> : vector<8x384xf32>
    %5 = tpu.matmul %0, %4, %cst_7 {dimension_numbers = #tpu.dot_dimension_numbers<[1], [0], [0], [1], [0, 0, 1, 1], [], []>} : vector<8x128xf32>, vector<128x384xf32>, vector<8x384xf32> -> vector<8x384xf32>
    %6 = arith.addf %3, %5 : vector<8x384xf32>
    %c0_8 = arith.constant 0 : index
    %c0_9 = arith.constant 0 : index
    %7 = vector.load %arg5[%c0_8, %c0_9] : memref<1x384xf32, #tpu.memory_space<vmem>>, vector<1x384xf32>
    %8 = vector.broadcast %7 : vector<1x384xf32> to vector<8x384xf32>
    %9 = arith.addf %6, %8 : vector<8x384xf32>
    %10 = vector.extract_strided_slice %9 {offsets = [0, 0], sizes = [8, 128], strides = [1, 1]} : vector<8x384xf32> to vector<8x128xf32>
    %11 = arith.negf %10 : vector<8x128xf32>
    %12 = math.exp %11 : vector<8x128xf32>
    %cst_10 = arith.constant 1.000000e+00 : f32
    %13 = vector.broadcast %cst_10 : f32 to vector<8x128xf32>
    %14 = arith.addf %13, %12 : vector<8x128xf32>
    %15 = arith.divf %13, %14 : vector<8x128xf32>
    %16 = vector.extract_strided_slice %9 {offsets = [0, 128], sizes = [8, 128], strides = [1, 1]} : vector<8x384xf32> to vector<8x128xf32>
    %17 = arith.negf %16 : vector<8x128xf32>
    %18 = math.exp %17 : vector<8x128xf32>
    %cst_11 = arith.constant 1.000000e+00 : f32
    %19 = vector.broadcast %cst_11 : f32 to vector<8x128xf32>
    %20 = arith.addf %19, %18 : vector<8x128xf32>
    %21 = arith.divf %19, %20 : vector<8x128xf32>
    %22 = arith.mulf %21, %0 : vector<8x128xf32>
    %c0_12 = arith.constant 0 : index
    %c0_13 = arith.constant 0 : index
    %23 = vector.load %arg6[%c0_12, %c0_13] : memref<128x128xf32, #tpu.memory_space<vmem>>, vector<128x128xf32>
    %cst_14 = arith.constant dense<0.000000e+00> : vector<8x128xf32>
    %24 = tpu.matmul %22, %23, %cst_14 {dimension_numbers = #tpu.dot_dimension_numbers<[1], [0], [0], [1], [0, 0, 1, 1], [], []>} : vector<8x128xf32>, vector<128x128xf32>, vector<8x128xf32> -> vector<8x128xf32>
    %25 = vector.extract_strided_slice %9 {offsets = [0, 256], sizes = [8, 128], strides = [1, 1]} : vector<8x384xf32> to vector<8x128xf32>
    %26 = arith.addf %25, %24 : vector<8x128xf32>
    %27 = math.tanh %26 : vector<8x128xf32>
    %28 = arith.subf %27, %0 : vector<8x128xf32>
    %29 = arith.mulf %15, %28 : vector<8x128xf32>
    %30 = arith.addf %0, %29 : vector<8x128xf32>
    %c0_15 = arith.constant 0 : index
    %c0_16 = arith.constant 0 : index
    %31 = vector.load %arg7[%c0_15, %c0_16] : memref<8x128xf32, #tpu.memory_space<vmem>>, vector<8x128xf32>
    tpu.vector_store %arg7[%c0_15, %c0_16], %30 {strides = array<i32>} : memref<8x128xf32, #tpu.memory_space<vmem>>, vector<8x128xf32>,
    return
  }
  func.func @transform_0(%arg0: i32) -> (i32, i32) {
    %c0_i32 = arith.constant 0 : i32
    %c0_i32_0 = arith.constant 0 : i32
    return %arg0, %c0_i32 : i32, i32
  }
  func.func @transform_1(%arg0: i32) -> (i32, i32) {
    %c0_i32 = arith.constant 0 : i32
    %c0_i32_0 = arith.constant 0 : i32
    return %arg0, %c0_i32 : i32, i32
  }
  func.func @transform_2(%arg0: i32) -> (i32, i32) {
    %c0_i32 = arith.constant 0 : i32
    %c0_i32_0 = arith.constant 0 : i32
    %c0_i32_1 = arith.constant 0 : i32
    return %c0_i32, %c0_i32_0 : i32, i32
  }
  func.func @transform_3(%arg0: i32) -> (i32, i32) {
    %c0_i32 = arith.constant 0 : i32
    %c0_i32_0 = arith.constant 0 : i32
    %c0_i32_1 = arith.constant 0 : i32
    return %c0_i32, %c0_i32_0 : i32, i32
  }
  func.func @transform_4(%arg0: i32) -> (i32, i32) {
    %c0_i32 = arith.constant 0 : i32
    %c0_i32_0 = arith.constant 0 : i32
    %c0_i32_1 = arith.constant 0 : i32
    return %c0_i32, %c0_i32_0 : i32, i32
  }
  func.func @transform_5(%arg0: i32) -> (i32, i32) {
    %c0_i32 = arith.constant 0 : i32
    %c0_i32_0 = arith.constant 0 : i32
    %c0_i32_1 = arith.constant 0 : i32
    return %c0_i32, %c0_i32_0 : i32, i32
  }
  func.func @transform_6(%arg0: i32) -> (i32, i32) {
    %c0_i32 = arith.constant 0 : i32
    %c0_i32_0 = arith.constant 0 : i32
    return %arg0, %c0_i32 : i32, i32
  }
}

</mosaic_0001>

<llo_original>
// kernel: tpu_custom_call.1
$region0: #{tpu_custom_call.1}
  #allocation0 [shape = 'u32[]', space=smem, size = 0x4, offset = 0x4, fixed_abs, tag = 'smem constant byte address 0x4 - core index']
  #allocation1 [shape = 'u32[144,128]{1,0:T(1,128)}', space=vmem, size = 0x12000, scoped, tag = 'internal scratch']
  %s0 = inlined_call_operand.hbm [shape: f32[8,24], index: 0, kind: input, shape index: {}]
  %s1 = inlined_call_operand.hbm [shape: f32[8,128], index: 1, kind: input, shape index: {}]
  %s2 = inlined_call_operand.hbm [shape: f32[24,384], index: 2, kind: input, shape index: {}]
  %s3 = inlined_call_operand.hbm [shape: f32[128,384], index: 3, kind: input, shape index: {}]
  %s4 = inlined_call_operand.vmem [shape: f32[1,384], index: 4, kind: input, shape index: {}]
  %s5 = inlined_call_operand.hbm [shape: f32[128,128], index: 5, kind: input, shape index: {}]
  %s6 = inlined_call_operand.hbm [shape: f32[8,128], index: 6, kind: output, shape index: {}]
  %s7 = sld [smem:[#allocation0]]
  $region54: #{tpu_custom_call.1} parent=0
    _
  %s9 = ssub.s32 1, %s7
  %s10 = scalar_select 0, %s9, %s7
  $region1: #{tpu_custom_call.1} parent=0
    #allocation2 [shape = 'u8[4096]{0}', space=vmem, size = 0x1000, scoped, tag = 'input window, operand 0, single buffered']
    #allocation3 [shape = 's32[1]{0}', space=sflag, size = 0x4, scoped, tag = 'scoped memory for tpu_custom_call.1']
    #allocation4 [shape = 's32[1]{0}', space=sflag, size = 0x4, scoped, tag = 'scoped memory for tpu_custom_call.1']
    #allocation5 [shape = 'u8[4096]{0}', space=vmem, size = 0x1000, scoped, tag = 'input window, operand 1, single buffered']
    #allocation6 [shape = 's32[1]{0}', space=sflag, size = 0x4, scoped, tag = 'scoped memory for tpu_custom_call.1']
    #allocation7 [shape = 'u8[36864]{0}', space=vmem, size = 0x9000, scoped, tag = 'input window, operand 2, single buffered']
    #allocation8 [shape = 'u8[196608]{0}', space=vmem, size = 0x30000, scoped, tag = 'input window, operand 3, single buffered']
    #allocation9 [shape = 's32[1]{0}', space=sflag, size = 0x4, scoped, tag = 'scoped memory for tpu_custom_call.1']
    #allocation10 [shape = 'u8[65536]{0}', space=vmem, size = 0x10000, scoped, tag = 'input window, operand 5, single buffered']
    #allocation11 [shape = 'u8[4096]{0}', space=vmem, size = 0x1000, scoped, tag = 'output window, operand 0, single buffered']
    %11 = vsyncpa [#allocation3], 0
    %12 = vsyncpa [#allocation6], 0
    %13 = vsyncpa [#allocation9], 0
    %14 = vsyncpa [#allocation4], 0
    // Predicated region
    $region2: #{tpu_custom_call.1} parent=1 // pred_check
      _
    $region3: #{tpu_custom_call.1} parent=1 // pred_check_branch
      %16 = sbr.rel (0) target = $region5
    $region4: #{tpu_custom_call.1} parent=1 // pred_region
      %s18 = ssub.s32 128, 128
      %19 = vsyncadd [#allocation3], %s18
      %s21 = sshll.u32 [#allocation2], 4
      %s22 = int_to_ptr.vmem [resolvable:$true] %s21
      %24 = dma.hbm_to_vmem [thread:$0]  %s0, 128, %s22, [#allocation3]
    $region5: #{tpu_custom_call.1} parent=1 // pred_fallthru
      _
    // Predicated region
    $region6: #{tpu_custom_call.1} parent=1 // pred_check
      _
    $region7: #{tpu_custom_call.1} parent=1 // pred_check_branch
      %26 = sbr.rel (0) target = $region9
    $region8: #{tpu_custom_call.1} parent=1 // pred_region
      %s28 = ssub.s32 128, 128
      %29 = vsyncadd [#allocation6], %s28
      %s31 = sshll.u32 [#allocation5], 4
      %s32 = int_to_ptr.vmem [resolvable:$true] %s31
      %34 = dma.hbm_to_vmem [thread:$0]  %s1, 128, %s32, [#allocation6]
    $region9: #{tpu_custom_call.1} parent=1 // pred_fallthru
      _
    // Predicated region
    $region10: #{tpu_custom_call.1} parent=1 // pred_check
      _
    $region11: #{tpu_custom_call.1} parent=1 // pred_check_branch
      %36 = sbr.rel (0) target = $region13
    $region12: #{tpu_custom_call.1} parent=1 // pred_region
      %s38 = ssub.s32 1152, 1152
      %39 = vsyncadd [#allocation6], %s38
      %s40 = sshll.u32 [#allocation7], 4
      %s41 = int_to_ptr.vmem [resolvable:$true] %s40
      %46 = dma.hbm_to_vmem [thread:$0]  %s2, 1152, %s41, [#allocation6], 384, 384, 24
    $region13: #{tpu_custom_call.1} parent=1 // pred_fallthru
      _
    // Predicated region
    $region14: #{tpu_custom_call.1} parent=1 // pred_check
      _
    $region15: #{tpu_custom_call.1} parent=1 // pred_check_branch
      %48 = sbr.rel (0) target = $region17
    $region16: #{tpu_custom_call.1} parent=1 // pred_region
      %s50 = ssub.s32 6144, 6144
      %51 = vsyncadd [#allocation9], %s50
      %s52 = sshll.u32 [#allocation8], 4
      %s53 = int_to_ptr.vmem [resolvable:$true] %s52
      %58 = dma.hbm_to_vmem [thread:$0]  %s3, 6144, %s53, [#allocation9], 384, 384, 24
    $region17: #{tpu_custom_call.1} parent=1 // pred_fallthru
      _
    // Predicated region
    $region18: #{tpu_custom_call.1} parent=1 // pred_check
      _
    $region19: #{tpu_custom_call.1} parent=1 // pred_check_branch
      %60 = sbr.rel (0) target = $region21
    $region20: #{tpu_custom_call.1} parent=1 // pred_region
      _
    $region21: #{tpu_custom_call.1} parent=1 // pred_fallthru
      _
    // Predicated region
    $region22: #{tpu_custom_call.1} parent=1 // pred_check
      _
    $region23: #{tpu_custom_call.1} parent=1 // pred_check_branch
      %62 = sbr.rel (0) target = $region25
    $region24: #{tpu_custom_call.1} parent=1 // pred_region
      %s64 = ssub.s32 2048, 2048
      %65 = vsyncadd [#allocation9], %s64
      %s66 = sshll.u32 [#allocation10], 4
      %s67 = int_to_ptr.vmem [resolvable:$true] %s66
      %72 = dma.hbm_to_vmem [thread:$0]  %s5, 2048, %s67, [#allocation9], 128, 128, 8
    $region25: #{tpu_custom_call.1} parent=1 // pred_fallthru
      _
    // Predicated region
    $region26: #{tpu_custom_call.1} parent=1 // pred_check
      _
    $region27: #{tpu_custom_call.1} parent=1 // pred_check_branch
      %74 = sbr.rel (0) target = $region29
    $region28: #{tpu_custom_call.1} parent=1 // pred_region
      %75 = dma.done [#allocation3], 128
    $region29: #{tpu_custom_call.1} parent=1 // pred_fallthru
      _
    // Predicated region
    $region30: #{tpu_custom_call.1} parent=1 // pred_check
      _
    $region31: #{tpu_custom_call.1} parent=1 // pred_check_branch
      %77 = sbr.rel (0) target = $region33
    $region32: #{tpu_custom_call.1} parent=1 // pred_region
      %78 = dma.done [#allocation6], 128
    $region33: #{tpu_custom_call.1} parent=1 // pred_fallthru
      _
    // Predicated region
    $region34: #{tpu_custom_call.1} parent=1 // pred_check
      _
    $region35: #{tpu_custom_call.1} parent=1 // pred_check_branch
      %80 = sbr.rel (0) target = $region37
    $region36: #{tpu_custom_call.1} parent=1 // pred_region
      %81 = dma.done [#allocation6], 1152
    $region37: #{tpu_custom_call.1} parent=1 // pred_fallthru
      _
    // Predicated region
    $region38: #{tpu_custom_call.1} parent=1 // pred_check
      _
    $region39: #{tpu_custom_call.1} parent=1 // pred_check_branch
      %83 = sbr.rel (0) target = $region41
    $region40: #{tpu_custom_call.1} parent=1 // pred_region
      %84 = dma.done [#allocation9], 6144
    $region41: #{tpu_custom_call.1} parent=1 // pred_fallthru
      _
    // Predicated region
    $region42: #{tpu_custom_call.1} parent=1 // pred_check
      _
    $region43: #{tpu_custom_call.1} parent=1 // pred_check_branch
      %86 = sbr.rel (0) target = $region45
    $region44: #{tpu_custom_call.1} parent=1 // pred_region
      %87 = dma.done [#allocation9], 2048
    $region45: #{tpu_custom_call.1} parent=1 // pred_fallthru
      _
    %v88 = vld [vmem:[#allocation5] sm:$0xff]
    %v89 = vld [vmem:[#allocation2] sm:$0xff]
    %v90 = vld [vmem:[#allocation7] sm:$0xff]
    %v91 = vld [vmem:[#allocation7 + $0x8] sm:$0xff]
    %v92 = vld [vmem:[#allocation7 + $0x10] sm:$0xff]
    %v93 = vld [vmem:[#allocation7 + $0x18] sm:$0xff]
    %v94 = vld [vmem:[#allocation7 + $0x20] sm:$0xff]
    %v95 = vld [vmem:[#allocation7 + $0x28] sm:$0xff]
    %v96 = vld [vmem:[#allocation7 + $0x30] sm:$0xff]
    %v97 = vld [vmem:[#allocation7 + $0x38] sm:$0xff]
    %v98 = vld [vmem:[#allocation7 + $0x40] sm:$0xff]
    %v99 = vld [vmem:[#allocation8] sm:$0xff]
    %v100 = vld [vmem:[#allocation8 + $0x8] sm:$0xff]
    %v101 = vld [vmem:[#allocation8 + $0x10] sm:$0xff]
    %v102 = vld [vmem:[#allocation8 + $0x18] sm:$0xff]
    %v103 = vld [vmem:[#allocation8 + $0x20] sm:$0xff]
    %v104 = vld [vmem:[#allocation8 + $0x28] sm:$0xff]
    %v105 = vld [vmem:[#allocation8 + $0x30] sm:$0xff]
    %v106 = vld [vmem:[#allocation8 + $0x38] sm:$0xff]
    %v107 = vld [vmem:[#allocation8 + $0x40] sm:$0xff]
    %v108 = vld [vmem:[#allocation8 + $0x48] sm:$0xff]
    %v109 = vld [vmem:[#allocation8 + $0x50] sm:$0xff]
    %v110 = vld [vmem:[#allocation8 + $0x58] sm:$0xff]
    %v111 = vld [vmem:[#allocation8 + $0x60] sm:$0xff]
    %v112 = vld [vmem:[#allocation8 + $0x68] sm:$0xff]
    %v113 = vld [vmem:[#allocation8 + $0x70] sm:$0xff]
    %v114 = vld [vmem:[#allocation8 + $0x78] sm:$0xff]
    %v115 = vld [vmem:[#allocation8 + $0x80] sm:$0xff]
    %v116 = vld [vmem:[#allocation8 + $0x88] sm:$0xff]
    %v117 = vld [vmem:[#allocation8 + $0x90] sm:$0xff]
    %v118 = vld [vmem:[#allocation8 + $0x98] sm:$0xff]
    %v119 = vld [vmem:[#allocation8 + $0xa0] sm:$0xff]
    %v120 = vld [vmem:[#allocation8 + $0xa8] sm:$0xff]
    %v121 = vld [vmem:[#allocation8 + $0xb0] sm:$0xff]
    %v122 = vld [vmem:[#allocation8 + $0xb8] sm:$0xff]
    %v123 = vld [vmem:[#allocation8 + $0xc0] sm:$0xff]
    %v124 = vld [vmem:[#allocation8 + $0xc8] sm:$0xff]
    %v125 = vld [vmem:[#allocation8 + $0xd0] sm:$0xff]
    %v126 = vld [vmem:[#allocation8 + $0xd8] sm:$0xff]
    %v127 = vld [vmem:[#allocation8 + $0xe0] sm:$0xff]
    %v128 = vld [vmem:[#allocation8 + $0xe8] sm:$0xff]
    %v129 = vld [vmem:[#allocation8 + $0xf0] sm:$0xff]
    %v130 = vld [vmem:[#allocation8 + $0xf8] sm:$0xff]
    %v131 = vld [vmem:[#allocation8 + $0x100] sm:$0xff]
    %v132 = vld [vmem:[#allocation8 + $0x108] sm:$0xff]
    %v133 = vld [vmem:[#allocation8 + $0x110] sm:$0xff]
    %v134 = vld [vmem:[#allocation8 + $0x118] sm:$0xff]
    %v135 = vld [vmem:[#allocation8 + $0x120] sm:$0xff]
    %v136 = vld [vmem:[#allocation8 + $0x128] sm:$0xff]
    %v137 = vld [vmem:[#allocation8 + $0x130] sm:$0xff]
    %v138 = vld [vmem:[#allocation8 + $0x138] sm:$0xff]
    %v139 = vld [vmem:[#allocation8 + $0x140] sm:$0xff]
    %v140 = vld [vmem:[#allocation8 + $0x148] sm:$0xff]
    %v141 = vld [vmem:[#allocation8 + $0x150] sm:$0xff]
    %v142 = vld [vmem:[#allocation8 + $0x158] sm:$0xff]
    %v143 = vld [vmem:[#allocation8 + $0x160] sm:$0xff]
    %v144 = vld [vmem:[#allocation8 + $0x168] sm:$0xff]
    %v145 = vld [vmem:[#allocation8 + $0x170] sm:$0xff]
    %v146 = vld [vmem:[#allocation8 + $0x178] sm:$0xff]
    %147 = vmatprep.subr.mxu0 %v100
    %148 = vmatpush1.msra.mxu0 %v99
    %149 = vmatprep.subr.mxu0 %v103
    %150 = vmatpush1.msra.mxu0 %v102
    %151 = vmatprep.subr.mxu0 %v106
    %152 = vmatpush1.msra.mxu0 %v105
    %153 = vmatprep.subr.mxu0 %v109
    %154 = vmatpush1.msra.mxu0 %v108
    %155 = vmatprep.subr.mxu0 %v112
    %156 = vmatpush1.msra.mxu0 %v111
    %157 = vmatprep.subr.mxu0 %v115
    %158 = vmatpush1.msra.mxu0 %v114
    %159 = vmatprep.subr.mxu0 %v118
    %160 = vmatpush1.msra.mxu0 %v117
    %161 = vmatprep.subr.mxu0 %v121
    %162 = vmatpush1.msra.mxu0 %v120
    %163 = vmatprep.subr.mxu0 %v124
    %164 = vmatpush1.msra.mxu0 %v123
    %165 = vmatprep.subr.mxu0 %v127
    %166 = vmatpush1.msra.mxu0 %v126
    %167 = vmatprep.subr.mxu0 %v130
    %168 = vmatpush1.msra.mxu0 %v129
    %169 = vmatprep.subr.mxu0 %v133
    %170 = vmatpush1.msra.mxu0 %v132
    %171 = vmatprep.subr.mxu0 %v136
    %172 = vmatpush1.msra.mxu0 %v135
    %173 = vmatprep.subr.mxu0 %v139
    %174 = vmatpush1.msra.mxu0 %v138
    %175 = vmatprep.subr.mxu0 %v142
    %176 = vmatpush1.msra.mxu0 %v141
    %177 = vmatprep.subr.mxu0 %v145
    %178 = vmatpush1.msra.mxu0 %v144
    %179 = vmatprep.subr.mxu0 0.0
    %180 = vmatpush1.msra.mxu0 0.0
    %181 = vmatprep.subr.mxu0 0.0
    %182 = vmatpush1.msra.mxu0 0.0
    %183 = vmatprep.subr.mxu0 0.0
    %184 = vmatpush1.msra.mxu0 0.0
    %185 = vmatprep.subr.mxu0 0.0
    %186 = vmatpush1.msra.mxu0 0.0
    %187 = vmatprep.subr.mxu0 0.0
    %188 = vmatpush1.msra.mxu0 0.0
    %189 = vmatprep.subr.mxu0 0.0
    %190 = vmatpush1.msra.mxu0 0.0
    %191 = vmatprep.subr.mxu0 0.0
    %192 = vmatpush1.msra.mxu0 0.0
    %193 = vmatprep.subr.mxu0 0.0
    %194 = vmatpush1.msra.mxu0 0.0
    %195 = vmatprep.subr.mxu0 0.0
    %196 = vmatpush1.msra.mxu0 0.0
    %197 = vmatprep.subr.mxu0 0.0
    %198 = vmatpush1.msra.mxu0 0.0
    %199 = vmatprep.subr.mxu0 0.0
    %200 = vmatpush1.msra.mxu0 0.0
    %201 = vmatprep.subr.mxu0 0.0
    %202 = vmatpush1.msra.mxu0 0.0
    %203 = vmatprep.subr.mxu0 0.0
    %204 = vmatpush1.msra.mxu0 0.0
    %205 = vmatprep.subr.mxu0 0.0
    %206 = vmatpush1.msra.mxu0 0.0
    %207 = vmatprep.subr.mxu0 0.0
    %208 = vmatpush1.msra.mxu0 0.0
    %209 = vmatprep.subr.mxu0 0.0
    %210 = vmatpush1.msra.mxu0 0.0
    %211 = vmatprep.mubr.f32.mxu0 0.0
    %212 = vmatmul.mubr.f32.gmra.mrb[0].mxu0 %v88
    %v213 = vpop.f32.mrb[0].mxu0
    %v214 = vadd.f32 0.0, %v213
    %v215 = vpop.f32.mrb[0].mxu0
    %v216 = vadd.f32 0.0, %v215
    %217 = vdwg.mxu0
    %218 = vmatprep.subr.mxu0 0.0
    %219 = vmatpush1.msra.mxu0 %v101
    %220 = vmatprep.subr.mxu0 0.0
    %221 = vmatpush1.msra.mxu0 %v104
    %222 = vmatprep.subr.mxu0 0.0
    %223 = vmatpush1.msra.mxu0 %v107
    %224 = vmatprep.subr.mxu0 0.0
    %225 = vmatpush1.msra.mxu0 %v110
    %226 = vmatprep.subr.mxu0 0.0
    %227 = vmatpush1.msra.mxu0 %v113
    %228 = vmatprep.subr.mxu0 0.0
    %229 = vmatpush1.msra.mxu0 %v116
    %230 = vmatprep.subr.mxu0 0.0
    %231 = vmatpush1.msra.mxu0 %v119
    %232 = vmatprep.subr.mxu0 0.0
    %233 = vmatpush1.msra.mxu0 %v122
    %234 = vmatprep.subr.mxu0 0.0
    %235 = vmatpush1.msra.mxu0 %v125
    %236 = vmatprep.subr.mxu0 0.0
    %237 = vmatpush1.msra.mxu0 %v128
    %238 = vmatprep.subr.mxu0 0.0
    %239 = vmatpush1.msra.mxu0 %v131
    %240 = vmatprep.subr.mxu0 0.0
    %241 = vmatpush1.msra.mxu0 %v134
    %242 = vmatprep.subr.mxu0 0.0
    %243 = vmatpush1.msra.mxu0 %v137
    %244 = vmatprep.subr.mxu0 0.0
    %245 = vmatpush1.msra.mxu0 %v140
    %246 = vmatprep.subr.mxu0 0.0
    %247 = vmatpush1.msra.mxu0 %v143
    %248 = vmatprep.subr.mxu0 0.0
    %249 = vmatpush1.msra.mxu0 %v146
    %250 = vmatprep.subr.mxu0 0.0
    %251 = vmatpush1.msra.mxu0 0.0
    %252 = vmatprep.subr.mxu0 0.0
    %253 = vmatpush1.msra.mxu0 0.0
    %254 = vmatprep.subr.mxu0 0.0
    %255 = vmatpush1.msra.mxu0 0.0
    %256 = vmatprep.subr.mxu0 0.0
    %257 = vmatpush1.msra.mxu0 0.0
    %258 = vmatprep.subr.mxu0 0.0
    %259 = vmatpush1.msra.mxu0 0.0
    %260 = vmatprep.subr.mxu0 0.0
    %261 = vmatpush1.msra.mxu0 0.0
    %262 = vmatprep.subr.mxu0 0.0
    %263 = vmatpush1.msra.mxu0 0.0
    %264 = vmatprep.subr.mxu0 0.0
    %265 = vmatpush1.msra.mxu0 0.0
    %266 = vmatprep.subr.mxu0 0.0
    %267 = vmatpush1.msra.mxu0 0.0
    %268 = vmatprep.subr.mxu0 0.0
    %269 = vmatpush1.msra.mxu0 0.0
    %270 = vmatprep.subr.mxu0 0.0
    %271 = vmatpush1.msra.mxu0 0.0
    %272 = vmatprep.subr.mxu0 0.0
    %273 = vmatpush1.msra.mxu0 0.0
    %274 = vmatprep.subr.mxu0 0.0
    %275 = vmatpush1.msra.mxu0 0.0
    %276 = vmatprep.subr.mxu0 0.0
    %277 = vmatpush1.msra.mxu0 0.0
    %278 = vmatprep.subr.mxu0 0.0
    %279 = vmatpush1.msra.mxu0 0.0
    %280 = vmatprep.subr.mxu0 0.0
    %281 = vmatpush1.msra.mxu0 0.0
    %282 = vmatprep.mubr.f32.mxu0 0.0
    %283 = vmatmul.mubr.f32.gmra.mrb[0].mxu0 %v88
    %v284 = vpop.f32.mrb[0].mxu0
    %v285 = vadd.f32 0.0, %v284
    %v286 = vpop.f32.mrb[0].mxu0
    %287 = vdwg.mxu0
    %vm288 = vcmask 195584
    %v290 = vsel %vm288, %v89, 0
    %292 = vmatprep.subr.mxu0 %v91
    %293 = vmatpush1.msra.mxu0 %v90
    %294 = vmatprep.subr.mxu0 %v94
    %295 = vmatpush1.msra.mxu0 %v93
    %296 = vmatprep.subr.mxu0 %v97
    %297 = vmatpush1.msra.mxu0 %v96
    %298 = vmatprep.subr.mxu0 0.0
    %299 = vmatpush1.msra.mxu0 0.0
    %300 = vmatprep.subr.mxu0 0.0
    %301 = vmatpush1.msra.mxu0 0.0
    %302 = vmatprep.subr.mxu0 0.0
    %303 = vmatpush1.msra.mxu0 0.0
    %304 = vmatprep.subr.mxu0 0.0
    %305 = vmatpush1.msra.mxu0 0.0
    %306 = vmatprep.subr.mxu0 0.0
    %307 = vmatpush1.msra.mxu0 0.0
    %308 = vmatprep.subr.mxu0 0.0
    %309 = vmatpush1.msra.mxu0 0.0
    %310 = vmatprep.subr.mxu0 0.0
    %311 = vmatpush1.msra.mxu0 0.0
    %312 = vmatprep.subr.mxu0 0.0
    %313 = vmatpush1.msra.mxu0 0.0
    %314 = vmatprep.subr.mxu0 0.0
    %315 = vmatpush1.msra.mxu0 0.0
    %316 = vmatprep.subr.mxu0 0.0
    %317 = vmatpush1.msra.mxu0 0.0
    %318 = vmatprep.subr.mxu0 0.0
    %319 = vmatpush1.msra.mxu0 0.0
    %320 = vmatprep.subr.mxu0 0.0
    %321 = vmatpush1.msra.mxu0 0.0
    %322 = vmatprep.subr.mxu0 0.0
    %323 = vmatpush1.msra.mxu0 0.0
    %324 = vmatprep.subr.mxu0 0.0
    %325 = vmatpush1.msra.mxu0 0.0
    %326 = vmatprep.subr.mxu0 0.0
    %327 = vmatpush1.msra.mxu0 0.0
    %328 = vmatprep.subr.mxu0 0.0
    %329 = vmatpush1.msra.mxu0 0.0
    %330 = vmatprep.subr.mxu0 0.0
    %331 = vmatpush1.msra.mxu0 0.0
    %332 = vmatprep.subr.mxu0 0.0
    %333 = vmatpush1.msra.mxu0 0.0
    %334 = vmatprep.subr.mxu0 0.0
    %335 = vmatpush1.msra.mxu0 0.0
    %336 = vmatprep.subr.mxu0 0.0
    %337 = vmatpush1.msra.mxu0 0.0
    %338 = vmatprep.subr.mxu0 0.0
    %339 = vmatpush1.msra.mxu0 0.0
    %340 = vmatprep.subr.mxu0 0.0
    %341 = vmatpush1.msra.mxu0 0.0
    %342 = vmatprep.subr.mxu0 0.0
    %343 = vmatpush1.msra.mxu0 0.0
    %344 = vmatprep.subr.mxu0 0.0
    %345 = vmatpush1.msra.mxu0 0.0
    %346 = vmatprep.subr.mxu0 0.0
    %347 = vmatpush1.msra.mxu0 0.0
    %348 = vmatprep.subr.mxu0 0.0
    %349 = vmatpush1.msra.mxu0 0.0
    %350 = vmatprep.subr.mxu0 0.0
    %351 = vmatpush1.msra.mxu0 0.0
    %352 = vmatprep.subr.mxu0 0.0
    %353 = vmatpush1.msra.mxu0 0.0
    %354 = vmatprep.subr.mxu0 0.0
    %355 = vmatpush1.msra.mxu0 0.0
    %356 = vmatprep.mubr.f32.mxu0 0.0
    %357 = vmatmul.mubr.f32.gmra.mrb[0].mxu0 %v290
    %v358 = vpop.f32.mrb[0].mxu0
    %v359 = vadd.f32 %v214, %v358
    %v360 = vpop.f32.mrb[0].mxu0
    %v361 = vadd.f32 %v216, %v360
    %362 = vdwg.mxu0
    %363 = vmatprep.subr.mxu0 0.0
    %364 = vmatpush1.msra.mxu0 %v92
    %365 = vmatprep.subr.mxu0 0.0
    %366 = vmatpush1.msra.mxu0 %v95
    %367 = vmatprep.subr.mxu0 0.0
    %368 = vmatpush1.msra.mxu0 %v98
    %369 = vmatprep.subr.mxu0 0.0
    %370 = vmatpush1.msra.mxu0 0.0
    %371 = vmatprep.subr.mxu0 0.0
    %372 = vmatpush1.msra.mxu0 0.0
    %373 = vmatprep.subr.mxu0 0.0
    %374 = vmatpush1.msra.mxu0 0.0
    %375 = vmatprep.subr.mxu0 0.0
    %376 = vmatpush1.msra.mxu0 0.0
    %377 = vmatprep.subr.mxu0 0.0
    %378 = vmatpush1.msra.mxu0 0.0
    %379 = vmatprep.subr.mxu0 0.0
    %380 = vmatpush1.msra.mxu0 0.0
    %381 = vmatprep.subr.mxu0 0.0
    %382 = vmatpush1.msra.mxu0 0.0
    %383 = vmatprep.subr.mxu0 0.0
    %384 = vmatpush1.msra.mxu0 0.0
    %385 = vmatprep.subr.mxu0 0.0
    %386 = vmatpush1.msra.mxu0 0.0
    %387 = vmatprep.subr.mxu0 0.0
    %388 = vmatpush1.msra.mxu0 0.0
    %389 = vmatprep.subr.mxu0 0.0
    %390 = vmatpush1.msra.mxu0 0.0
    %391 = vmatprep.subr.mxu0 0.0
    %392 = vmatpush1.msra.mxu0 0.0
    %393 = vmatprep.subr.mxu0 0.0
    %394 = vmatpush1.msra.mxu0 0.0
    %395 = vmatprep.subr.mxu0 0.0
    %396 = vmatpush1.msra.mxu0 0.0
    %397 = vmatprep.subr.mxu0 0.0
    %398 = vmatpush1.msra.mxu0 0.0
    %399 = vmatprep.subr.mxu0 0.0
    %400 = vmatpush1.msra.mxu0 0.0
    %401 = vmatprep.subr.mxu0 0.0
    %402 = vmatpush1.msra.mxu0 0.0
    %403 = vmatprep.subr.mxu0 0.0
    %404 = vmatpush1.msra.mxu0 0.0
    %405 = vmatprep.subr.mxu0 0.0
    %406 = vmatpush1.msra.mxu0 0.0
    %407 = vmatprep.subr.mxu0 0.0
    %408 = vmatpush1.msra.mxu0 0.0
    %409 = vmatprep.subr.mxu0 0.0
    %410 = vmatpush1.msra.mxu0 0.0
    %411 = vmatprep.subr.mxu0 0.0
    %412 = vmatpush1.msra.mxu0 0.0
    %413 = vmatprep.subr.mxu0 0.0
    %414 = vmatpush1.msra.mxu0 0.0
    %415 = vmatprep.subr.mxu0 0.0
    %416 = vmatpush1.msra.mxu0 0.0
    %417 = vmatprep.subr.mxu0 0.0
    %418 = vmatpush1.msra.mxu0 0.0
    %419 = vmatprep.subr.mxu0 0.0
    %420 = vmatpush1.msra.mxu0 0.0
    %421 = vmatprep.subr.mxu0 0.0
    %422 = vmatpush1.msra.mxu0 0.0
    %423 = vmatprep.subr.mxu0 0.0
    %424 = vmatpush1.msra.mxu0 0.0
    %425 = vmatprep.subr.mxu0 0.0
    %426 = vmatpush1.msra.mxu0 0.0
    %427 = vmatprep.mubr.f32.mxu0 0.0
    %428 = vmatmul.mubr.f32.gmra.mrb[0].mxu0 %v290
    %v429 = vpop.f32.mrb[0].mxu0
    %v430 = vadd.f32 %v285, %v429
    %v431 = vpop.f32.mrb[0].mxu0
    %432 = vdwg.mxu0
    %v433 = vld [vmem:[%s4] sm:$0x7]
    %v435 = vlaneseq
    %v436 = vshrl.u32 %v435, 7
    %v437 = vsub.s32 0, %v436
    %v438 = vrot.slane %v433, %v437
    %v439 = vlaneseq
    %v440 = vshrl.u32 %v439, 7
    %v441 = vsub.s32 1, %v440
    %v442 = vrot.slane %v433, %v441
    %v443 = vlaneseq
    %v444 = vshrl.u32 %v443, 7
    %v445 = vsub.s32 2, %v444
    %v446 = vrot.slane %v433, %v445
    %v450 = vadd.f32 %v359, %v438
    %v451 = vadd.f32 %v361, %v442
    %v452 = vadd.f32 %v430, %v446
    %v453 = vxor.u32 %v450, 2147483648
    %v454 = vmul.f32 %v453, 1.442695
    %v455 = vpow.pop %v454
    %v456 = vadd.f32 %v455, 1.0
    %v457 = vrcp.pop %v456
    %v458 = vmul.f32 1.0, %v457
    %v459 = vxor.u32 %v451, 2147483648
    %v460 = vmul.f32 %v459, 1.442695
    %v461 = vpow.pop %v460
    %v462 = vadd.f32 %v461, 1.0
    %v463 = vrcp.pop %v462
    %v464 = vmul.f32 1.0, %v463
    %v465 = vmul.f32 %v464, %v88
    %v466 = vld [vmem:[#allocation10] sm:$0xff]
    %v467 = vld [vmem:[#allocation10 + $0x8] sm:$0xff]
    %v468 = vld [vmem:[#allocation10 + $0x10] sm:$0xff]
    %v469 = vld [vmem:[#allocation10 + $0x18] sm:$0xff]
    %v470 = vld [vmem:[#allocation10 + $0x20] sm:$0xff]
    %v471 = vld [vmem:[#allocation10 + $0x28] sm:$0xff]
    %v472 = vld [vmem:[#allocation10 + $0x30] sm:$0xff]
    %v473 = vld [vmem:[#allocation10 + $0x38] sm:$0xff]
    %v474 = vld [vmem:[#allocation10 + $0x40] sm:$0xff]
    %v475 = vld [vmem:[#allocation10 + $0x48] sm:$0xff]
    %v476 = vld [vmem:[#allocation10 + $0x50] sm:$0xff]
    %v477 = vld [vmem:[#allocation10 + $0x58] sm:$0xff]
    %v478 = vld [vmem:[#allocation10 + $0x60] sm:$0xff]
    %v479 = vld [vmem:[#allocation10 + $0x68] sm:$0xff]
    %v480 = vld [vmem:[#allocation10 + $0x70] sm:$0xff]
    %v481 = vld [vmem:[#allocation10 + $0x78] sm:$0xff]
    %482 = vmatprep.subr.mxu0 0.0
    %483 = vmatpush1.msra.mxu0 %v466
    %484 = vmatprep.subr.mxu0 0.0
    %485 = vmatpush1.msra.mxu0 %v467
    %486 = vmatprep.subr.mxu0 0.0
    %487 = vmatpush1.msra.mxu0 %v468
    %488 = vmatprep.subr.mxu0 0.0
    %489 = vmatpush1.msra.mxu0 %v469
    %490 = vmatprep.subr.mxu0 0.0
    %491 = vmatpush1.msra.mxu0 %v470
    %492 = vmatprep.subr.mxu0 0.0
    %493 = vmatpush1.msra.mxu0 %v471
    %494 = vmatprep.subr.mxu0 0.0
    %495 = vmatpush1.msra.mxu0 %v472
    %496 = vmatprep.subr.mxu0 0.0
    %497 = vmatpush1.msra.mxu0 %v473
    %498 = vmatprep.subr.mxu0 0.0
    %499 = vmatpush1.msra.mxu0 %v474
    %500 = vmatprep.subr.mxu0 0.0
    %501 = vmatpush1.msra.mxu0 %v475
    %502 = vmatprep.subr.mxu0 0.0
    %503 = vmatpush1.msra.mxu0 %v476
    %504 = vmatprep.subr.mxu0 0.0
    %505 = vmatpush1.msra.mxu0 %v477
    %506 = vmatprep.subr.mxu0 0.0
    %507 = vmatpush1.msra.mxu0 %v478
    %508 = vmatprep.subr.mxu0 0.0
    %509 = vmatpush1.msra.mxu0 %v479
    %510 = vmatprep.subr.mxu0 0.0
    %511 = vmatpush1.msra.mxu0 %v480
    %512 = vmatprep.subr.mxu0 0.0
    %513 = vmatpush1.msra.mxu0 %v481
    %514 = vmatprep.subr.mxu0 0.0
    %515 = vmatpush1.msra.mxu0 0.0
    %516 = vmatprep.subr.mxu0 0.0
    %517 = vmatpush1.msra.mxu0 0.0
    %518 = vmatprep.subr.mxu0 0.0
    %519 = vmatpush1.msra.mxu0 0.0
    %520 = vmatprep.subr.mxu0 0.0
    %521 = vmatpush1.msra.mxu0 0.0
    %522 = vmatprep.subr.mxu0 0.0
    %523 = vmatpush1.msra.mxu0 0.0
    %524 = vmatprep.subr.mxu0 0.0
    %525 = vmatpush1.msra.mxu0 0.0
    %526 = vmatprep.subr.mxu0 0.0
    %527 = vmatpush1.msra.mxu0 0.0
    %528 = vmatprep.subr.mxu0 0.0
    %529 = vmatpush1.msra.mxu0 0.0
    %530 = vmatprep.subr.mxu0 0.0
    %531 = vmatpush1.msra.mxu0 0.0
    %532 = vmatprep.subr.mxu0 0.0
    %533 = vmatpush1.msra.mxu0 0.0
    %534 = vmatprep.subr.mxu0 0.0
    %535 = vmatpush1.msra.mxu0 0.0
    %536 = vmatprep.subr.mxu0 0.0
    %537 = vmatpush1.msra.mxu0 0.0
    %538 = vmatprep.subr.mxu0 0.0
    %539 = vmatpush1.msra.mxu0 0.0
    %540 = vmatprep.subr.mxu0 0.0
    %541 = vmatpush1.msra.mxu0 0.0
    %542 = vmatprep.subr.mxu0 0.0
    %543 = vmatpush1.msra.mxu0 0.0
    %544 = vmatprep.subr.mxu0 0.0
    %545 = vmatpush1.msra.mxu0 0.0
    %546 = vmatprep.mubr.f32.mxu0 0.0
    %547 = vmatmul.mubr.f32.gmra.mrb[0].mxu0 %v465
    %v548 = vpop.f32.mrb[0].mxu0
    %v549 = vadd.f32 0.0, %v548
    %v550 = vpop.f32.mrb[0].mxu0
    %551 = vdwg.mxu0
    %v552 = vadd.f32 %v452, %v549
    %v553 = vtanh.pop %v552
    %v554 = vsub.f32 %v553, %v88
    %v555 = vmul.f32 %v458, %v554
    %v556 = vadd.f32 %v88, %v555
    %557 = vst [vmem:[#allocation11] sm:$0xff] %v556
    // Predicated region
    $region46: #{tpu_custom_call.1} parent=1 // pred_check
      _
    $region47: #{tpu_custom_call.1} parent=1 // pred_check_branch
      %559 = sbr.rel (0) target = $region49
    $region48: #{tpu_custom_call.1} parent=1 // pred_region
      %s561 = ssub.s32 128, 128
      %562 = vsyncadd [#allocation4], %s561
      %s564 = sshll.u32 [#allocation11], 4
      %s565 = int_to_ptr.vmem [resolvable:$true] %s564
      %567 = dma.vmem_to_hbm [thread:$0]  %s565, 128, %s6, [#allocation4]
    $region49: #{tpu_custom_call.1} parent=1 // pred_fallthru
      _
    // Predicated region
    $region50: #{tpu_custom_call.1} parent=1 // pred_check
      _
    $region51: #{tpu_custom_call.1} parent=1 // pred_check_branch
      %569 = sbr.rel (0) target = $region53
    $region52: #{tpu_custom_call.1} parent=1 // pred_region
      %570 = dma.done [#allocation4], 128
    $region53: #{tpu_custom_call.1} parent=1 // pred_fallthru
      _
    %571 = vsyncpa [#allocation3], 1
    %572 = vsyncpa [#allocation6], 1
    %573 = vsyncpa [#allocation9], 1
    %574 = vsyncpa [#allocation4], 1

</llo_original>
